<compile_context>
chip_gen: v6e
topology: v6e:2x2x1
jax: 0.10.0
libtpu: 0.0.40
codegen_flags: <defaults>
</compile_context>

<pallas_src>
import jax
import jax.numpy as jnp
from jax.experimental import pallas as pl
from jax.experimental.pallas import tpu as pltpu


# ----------------------------------------------------------------------------
# Pallas kernel: identity pass-through (placeholder hot path for subclasses).
# ----------------------------------------------------------------------------
def _identity_kernel(x_ref, o_ref):
    o_ref[...] = x_ref[...]


def _round_up(x: int, m: int) -> int:
    return ((x + m - 1) // m) * m


@jax.jit
def _identity_forward_device(x: jax.Array) -> jax.Array:
    """Identity forward via a tiled, pipelined, lane-dense Pallas kernel.

    Works for any input shape/dtype: the tensor is flattened, packed into a
    (rows, cols) slab with cols a multiple of 128 (padding the tail), run
    through the kernel, then un-padded and restored to the original shape.
    """
    orig_shape = x.shape
    dtype = x.dtype
    n = int(x.size)
    itemsize = jnp.dtype(dtype).itemsize
    # Sublane packing minimum: 8 for 4-byte dtypes, 16 for bf16/f16, 32 for int8.
    sub = max(8, 32 // max(1, itemsize))

    # Lane-dense slab width: multiple of 128, capped at 4096; snapped to a
    # multiple of 1024 when wider than one column block so blocks tile evenly.
    cols = 128 * max(1, min(32, n // (128 * sub)))
    if cols > 1024:
        cols = 1024 * (cols // 1024)
    col_blk = min(cols, 1024)

    rows = pl.cdiv(n, cols)
    # Row block: multiple of the sublane packing minimum, capped at 512 so a
    # block is <= 2 MiB (f32) and the double-buffered in+out footprint stays
    # <= ~8 MiB (comfortably inside v7x's 32 MiB scoped / 64 MiB physical VMEM).
    row_blk = min(_round_up(rows, sub), 512)
    rows_p = _round_up(rows, row_blk)

    flat = x.reshape(-1)
    pad = rows_p * cols - n
    if pad:
        flat = jnp.pad(flat, (0, pad))
    x2d = flat.reshape(rows_p, cols)

    grid = (rows_p // row_blk, cols // col_blk)
    block_bytes = row_blk * col_blk * itemsize
    # Enough for double-buffered input + output blocks plus headroom, clamped
    # to the portable 32 MiB scoped-VMEM ceiling.
    vmem_limit = int(min(32 * 1024 * 1024, max(4 * 1024 * 1024, 6 * block_bytes)))

    out2d = pl.pallas_call(
        _identity_kernel,
        out_shape=jax.ShapeDtypeStruct((rows_p, cols), dtype),
        grid_spec=pl.GridSpec(
            grid=grid,
            in_specs=[pl.BlockSpec((row_blk, col_blk), lambda i, j: (i, j))],
            out_specs=pl.BlockSpec((row_blk, col_blk), lambda i, j: (i, j)),
        ),
        # Output aliases the input slab: no extra HBM allocation for the
        # identity path (XLA inserts a copy only when the operand is a
        # non-donated jit parameter).
        input_output_aliases={0: 0},
        compiler_params=pltpu.CompilerParams(
            dimension_semantics=("parallel", "parallel"),
            vmem_limit_bytes=vmem_limit,
        ),
    )(x2d)

    out_flat = out2d.reshape(-1)
    if pad:
        out_flat = out_flat[:n]
    return out_flat.reshape(orig_shape)


def identity_forward_pallas(x: jax.Array) -> jax.Array:
    """Public wrapper: runs the identity Pallas kernel, preserving shape/dtype."""
    return _identity_forward_device(x)


# ----------------------------------------------------------------------------
# BaseModel translation (no parameters, abstract forward, host-side logging).
# ----------------------------------------------------------------------------
class ModelLogger:
    """Minimal host-side stand-in for the original ModelLogger."""

    def __init__(self, model_name, output_dir="outputs"):
        self.model_name = model_name
        self.output_dir = output_dir

    def _log(self, msg):
        # Host-side logging only; intentionally quiet in this synthetic script.
        pass

    def log_model_info(self, msg):
        self._log(msg)

    def log_training_start(self, **kwargs):
        self._log(f"training start: {kwargs}")

    def log_epoch(self, epoch, train_loss, val_loss=None, val_acc=None, **kwargs):
        self._log(f"epoch {epoch}: {train_loss} {val_loss} {val_acc} {kwargs}")

    def log_evaluation(self, test_loss, test_acc, **kwargs):
        self._log(f"eval: {test_loss} {test_acc} {kwargs}")

    def log_error(self, msg):
        self._log(f"ERROR: {msg}")

    def log_warning(self, msg):
        self._log(f"WARNING: {msg}")


class BaseModel:
    """JAX translation of the abstract PyTorch BaseModel.

    Owns no parameters; `forward` raises exactly like the PyTorch original.
    """

    def __init__(self):
        self.logger = None
        self._params = {}  # BaseModel has no parameters

    # ---- parameter bookkeeping (mirrors nn.Module.parameters() count = 0) ----
    def parameters(self):
        return list(jax.tree_util.tree_leaves(self._params))

    def num_parameters(self):
        return sum(int(p.size) for p in self.parameters())

    # ---- logging utilities (host side, no device compute) -------------------
    def setup_logger(self, output_dir="outputs"):
        self.logger = ModelLogger(self.get_model_name(), output_dir)

    def get_model_name(self):
        return self.__class__.__name__

    def log_model_summary(self):
        if self.logger is None:
            self.setup_logger()
        total_params = self.num_parameters()
        trainable_params = total_params
        model_summary = (
            f"\nModel: {self.get_model_name()}\n"
            f"Total Parameters: {total_params:,}\n"
            f"Trainable Parameters: {trainable_params:,}\n"
            f"Architecture:\n{self}\n"
        )
        self.logger.log_model_info(model_summary)

    def log_training_start(self, **kwargs):
        if self.logger is None:
            self.setup_logger()
        self.logger.log_training_start(**kwargs)

    def log_epoch(self, epoch, train_loss, val_loss=None, val_acc=None, **kwargs):
        if self.logger is None:
            self.setup_logger()
        self.logger.log_epoch(epoch, train_loss, val_loss, val_acc, **kwargs)

    def log_evaluation(self, test_loss, test_acc, **kwargs):
        if self.logger is None:
            self.setup_logger()
        self.logger.log_evaluation(test_loss, test_acc, **kwargs)

    def log_error(self, error_msg):
        if self.logger is None:
            self.setup_logger()
        self.logger.log_error(error_msg)

    def log_warning(self, warning_msg):
        if self.logger is None:
            self.setup_logger()
        self.logger.log_warning(warning_msg)

    # ---- forward: abstract, exactly like the PyTorch original ---------------
    def forward(self, x):
        # TODO(synk): BaseModel.forward is abstract in the source module; there
        # is no compute to translate, so this raises just like PyTorch does.
        raise NotImplementedError("Subclasses must implement forward method")

    def __call__(self, x):
        return self.forward(x)


class _IdentityDemoModel(BaseModel):
    """Minimal concrete subclass used only to exercise the Pallas kernel path."""

    def forward(self, x):
        return identity_forward_pallas(x)


if __name__ == "__main__":
    key = jax.random.PRNGKey(0)
    x = jax.random.normal(key, (2, 4, 16, 16), dtype=jnp.float32)  # NCHW

    # 1) Faithful base-class semantics: forward must raise, 0 parameters.
    base = BaseModel()
    base.log_model_summary()
    assert base.num_parameters() == 0
    raised = False
    try:
        base(x)
    except NotImplementedError:
        raised = True
    assert raised, "BaseModel.forward must raise NotImplementedError"

    # 2) Run the Pallas kernel through a trivial concrete subclass.
    demo = _IdentityDemoModel()
    y = demo(x)
    jax.block_until_ready(y)
    assert y.shape == x.shape and y.dtype == x.dtype
    assert bool(jnp.allclose(y, x))

    # 3) Padding path with a lane-unfriendly spatial size (14x14) typical of
    #    CNN feature maps: the wrapper must still be exact.
    x2 = jax.random.normal(jax.random.PRNGKey(1), (2, 3, 14, 14), dtype=jnp.float32)
    y2 = demo(x2)
    jax.block_until_ready(y2)
    assert y2.shape == x2.shape and bool(jnp.allclose(y2, x2))

    # 4) Packed-dtype path (bf16, sublane packing = 16).
    x3 = jax.random.normal(jax.random.PRNGKey(2), (2, 4, 16, 16)).astype(jnp.bfloat16)
    y3 = demo(x3)
    jax.block_until_ready(y3)
    assert y3.shape == x3.shape and y3.dtype == x3.dtype
    assert bool(jnp.all(y3 == x3))

    print("KERNEL_OK")
</pallas_src>

<mosaic_0001>
module attributes {stable_mosaic.version = 11 : i64} {
  func.func @_identity_kernel(%arg0: i32, %arg1: i32, %arg2: memref<8x256xf32, #tpu.memory_space<vmem>>, %arg3: memref<8x256xf32, #tpu.memory_space<vmem>>) attributes {dimension_semantics = [#tpu.dimension_semantics<parallel>, #tpu.dimension_semantics<parallel>], iteration_bounds = array<i64: 1, 1>, scalar_prefetch = 0 : i64, scratch_operands = 0 : i64, tpu.core_type = #tpu.core_type<tc>, window_params = [{transform_indices = @transform_0, window_bounds = array<i64: 8, 256>}, {transform_indices = @transform_1, window_bounds = array<i64: 8, 256>}]} {
    %c0 = arith.constant 0 : index
    %c0_0 = arith.constant 0 : index
    %0 = vector.load %arg2[%c0, %c0_0] : memref<8x256xf32, #tpu.memory_space<vmem>>, vector<8x256xf32>
    %c0_1 = arith.constant 0 : index
    %c0_2 = arith.constant 0 : index
    %1 = vector.load %arg3[%c0_1, %c0_2] : memref<8x256xf32, #tpu.memory_space<vmem>>, vector<8x256xf32>
    tpu.vector_store %arg3[%c0_1, %c0_2], %0 {strides = array<i32>} : memref<8x256xf32, #tpu.memory_space<vmem>>, vector<8x256xf32>,
    return
  }
  func.func @transform_0(%arg0: i32, %arg1: i32) -> (i32, i32) {
    %c0_i32 = arith.constant 0 : i32
    return %arg0, %arg1 : i32, i32
  }
  func.func @transform_1(%arg0: i32, %arg1: i32) -> (i32, i32) {
    %c0_i32 = arith.constant 0 : i32
    return %arg0, %arg1 : i32, i32
  }
}

</mosaic_0001>

<llo_original>
// kernel: _identity_forward_device.1
$region0: #{_identity_forward_device.1}
  #allocation0 [shape = 'u32[]', space=smem, size = 0x4, offset = 0x4, fixed_abs, tag = 'smem constant byte address 0x4 - core index']
  #allocation1 [shape = 'u32[144,128]{1,0:T(1,128)}', space=vmem, size = 0x12000, scoped, tag = 'internal scratch']
  %s0 = inlined_call_operand.vmem [shape: f32[8,256], index: 0, kind: input, shape index: {}, may-alias: {0,1}]
  %s1 = inlined_call_operand.vmem [shape: f32[8,256], index: 1, kind: output, shape index: {}, may-alias: {0,1}]
  %s2 = sld [smem:[#allocation0]]
  $region14: #{_identity_forward_device.1} parent=0
    _
  %s4 = ssub.s32 1, %s2
  %s5 = scalar_select 0, %s4, %s2
  // Predicated region
  $region2: #{_identity_forward_device.1} parent=0 // pred_check
    _
  $region3: #{_identity_forward_device.1} parent=0 // pred_check_branch
    %7 = sbr.rel (0) target = $region5
  $region4: #{_identity_forward_device.1} parent=0 // pred_region
    _
  $region5: #{_identity_forward_device.1} parent=0 // pred_fallthru
    _
  %v8 = vld [vmem:[%s0] sm:$0xff]
  %v9 = vld [vmem:[%s0 + $0x8] sm:$0xff]
  %10 = vst [vmem:[%s1] sm:$0xff] %v8
  %11 = vst [vmem:[%s1 + $0x8] sm:$0xff] %v9
  // Predicated region
  $region6: #{_identity_forward_device.1} parent=0 // pred_check
    _
  $region7: #{_identity_forward_device.1} parent=0 // pred_check_branch
    %13 = sbr.rel (0) target = $region9
  $region8: #{_identity_forward_device.1} parent=0 // pred_region
    _
  $region9: #{_identity_forward_device.1} parent=0 // pred_fallthru
    _
  // Predicated region
  $region10: #{_identity_forward_device.1} parent=0 // pred_check
    _
  $region11: #{_identity_forward_device.1} parent=0 // pred_check_branch
    %15 = sbr.rel (0) target = $region13
  $region12: #{_identity_forward_device.1} parent=0 // pred_region
    _
  $region13: #{_identity_forward_device.1} parent=0 // pred_fallthru
    _

</llo_original>
